<compile_context>
chip_gen: v6e
topology: v6e:2x2x1
jax: 0.10.0
libtpu: 0.0.40
codegen_flags: <defaults>
</compile_context>

<pallas_src>
import math

import jax
import jax.numpy as jnp
from jax.experimental import pallas as pl
from jax.experimental.pallas import tpu as pltpu


def _round_up(x, m):
    return ((x + m - 1) // m) * m


def _pick_batch_tile(B):
    # >= 2 grid steps for B > 16 (pipelining + v7x 2-TC sharding); cap at 512
    # rows so (tile, 32) f32 intermediates stay well under vreg-file pressure.
    if B <= 16:
        return 8
    return min(512, _round_up(pl.cdiv(B, 2), 8))


def _deep_net_kernel(x_ref, w1_ref, b1_ref, wmid_ref, bmid_ref, w7_ref, b7_ref,
                     o_ref):
    """Linear -> Tanh (x6) -> Linear. f32 MXU accumulation throughout."""
    cdt = w1_ref.dtype          # matmul-input dtype (bf16 fast path or f32)
    edt = b1_ref.dtype          # elementwise (bias/tanh) dtype

    # x arrives as raw f32 from HBM; cast after load (no wrapper cast pass).
    h = x_ref[...].astype(cdt)

    def hidden_layer(h, w, b):
        h = jnp.dot(h, w, preferred_element_type=jnp.float32)
        return jnp.tanh(h.astype(edt) + b).astype(cdt)

    # fc1 (fan_in = D_in, fan_out zero-padded to D_pad).
    h = hidden_layer(h, w1_ref[...], b1_ref[...])

    # fc2..fc6 from the packed stacks; ref[l] with static l is a zero-cost view.
    for l in range(wmid_ref.shape[0]):
        h = hidden_layer(h, wmid_ref[l], bmid_ref[l])

    # fc7: no activation, f32 bias-add, unpadded (full last-dim) store.
    out = jnp.dot(h, w7_ref[...], preferred_element_type=jnp.float32) + b7_ref[...]
    o_ref[...] = out.astype(o_ref.dtype)


def deep_net_forward(x, params, *, batch_tile=None, compute_dtype=jnp.bfloat16):
    """params: w1..w7 pre-transposed to (in, out), b1..b7 of shape (1, out).

    compute_dtype=bf16: bf16 matmul inputs + bf16 bias/tanh (v6e/v7x fast path,
    f32 accumulation). compute_dtype=f32: strict f32 path (recommended on v5e,
    which has no bf16 VPU/EUP, and for exact parity with the PyTorch forward).
    """
    B, D_in = x.shape
    D_out = params["w7"].shape[1]

    weights = [params[f"w{l}"] for l in range(1, 8)]
    biases = [params[f"b{l}"] for l in range(1, 8)]

    # Common padded hidden width for the activations of layers 1..6. Padded
    # columns are exact zeros end-to-end (zero W rows/cols + zero bias cols),
    # so no output padding and no column slice are needed.
    hidden_widths = [w.shape[1] for w in weights[:-1]] + [weights[-1].shape[0]]
    D_pad = _round_up(max(hidden_widths), 8)

    def pad_cols(a, n):
        return a if a.shape[-1] == n else jnp.pad(a, ((0, 0), (0, n - a.shape[-1])))

    def pad_rows(a, n):
        return a if a.shape[0] == n else jnp.pad(a, ((0, n - a.shape[0]), (0, 0)))

    elem_dtype = compute_dtype

    # fc1 separate (consumes unpadded x); fc2..fc6 packed into single weight /
    # bias stacks; fc7 separate (produces the unpadded D_out output).
    w1 = pad_cols(weights[0], D_pad).astype(compute_dtype)
    b1 = pad_cols(biases[0], D_pad).astype(elem_dtype)
    w_mid = jnp.stack(
        [pad_rows(pad_cols(w, D_pad), D_pad) for w in weights[1:6]]
    ).astype(compute_dtype)
    b_mid = jnp.stack([pad_cols(b, D_pad) for b in biases[1:6]]).astype(elem_dtype)
    w7 = pad_rows(weights[6], D_pad).astype(compute_dtype)
    b7 = biases[6].astype(jnp.float32)

    if batch_tile is None:
        batch_tile = _pick_batch_tile(B)
    batch_tile = _round_up(max(batch_tile, 8), 8)
    B_pad = _round_up(B, batch_tile)

    # x stays f32 and feature-unpadded; only ragged batches get a row pad.
    x_in = x if B_pad == B else jnp.pad(x, ((0, B_pad - B), (0, 0)))

    def full_spec(arr):
        nd = arr.ndim
        return pl.BlockSpec(arr.shape, lambda i, _nd=nd: (0,) * _nd)

    grid = (B_pad // batch_tile,)

    grid_spec = pltpu.PrefetchScalarGridSpec(
        num_scalar_prefetch=0,
        grid=grid,
        in_specs=[pl.BlockSpec((batch_tile, D_in), lambda i: (i, 0)),
                  full_spec(w1), full_spec(b1),
                  full_spec(w_mid), full_spec(b_mid),
                  full_spec(w7), full_spec(b7)],
        out_specs=pl.BlockSpec((batch_tile, D_out), lambda i: (i, 0)),
    )

    flops = 2 * B_pad * (D_in * D_pad + 5 * D_pad * D_pad + D_pad * D_out)
    transcendentals = B_pad * 6 * D_pad
    bytes_accessed = (
        int(x_in.size) * x_in.dtype.itemsize
        + B_pad * D_out * 4
        + sum(int(a.size) * a.dtype.itemsize
              for a in (w1, b1, w_mid, b_mid, w7, b7)))

    out = pl.pallas_call(
        _deep_net_kernel,
        out_shape=jax.ShapeDtypeStruct((B_pad, D_out), jnp.float32),
        grid_spec=grid_spec,
        compiler_params=pltpu.CompilerParams(
            dimension_semantics=("parallel",),
            vmem_limit_bytes=32 * 1024 * 1024,  # far above actual use; safe on all gens
        ),
        cost_estimate=pl.CostEstimate(
            flops=flops,
            transcendentals=transcendentals,
            bytes_accessed=bytes_accessed,
        ),
    )(x_in, w1, b1, w_mid, b_mid, w7, b7)

    return out if B_pad == B else out[:B]


def init_params(key, input_size, h1, h2, h3, h4, h5, h6, h7, output_size):
    """nn.Linear-style U(-1/sqrt(fan_in), 1/sqrt(fan_in)) init.

    Stored pre-transposed: w is (in, out), b is (1, out).
    Note: Deep_Net defines fc5 = nn.Linear(h5, h6) while fc4 outputs h4
    features, so the PyTorch forward only works when h4 == h5."""
    assert h4 == h5, "Deep_Net.forward requires h4 == h5 (fc5 consumes fc4's output)"
    dims = [(input_size, h1), (h1, h2), (h2, h3), (h3, h4),
            (h5, h6), (h6, h7), (h7, output_size)]
    params = {}
    for idx, (fan_in, fan_out) in enumerate(dims, start=1):
        key, kw, kb = jax.random.split(key, 3)
        bound = 1.0 / math.sqrt(fan_in)
        params[f"w{idx}"] = jax.random.uniform(
            kw, (fan_in, fan_out), jnp.float32, -bound, bound)
        params[f"b{idx}"] = jax.random.uniform(
            kb, (1, fan_out), jnp.float32, -bound, bound)
    return params


def deep_net_forward_ref(x, params):
    """Pure-JAX f32 reference (matches the PyTorch forward)."""
    h = x
    for l in range(1, 7):
        h = jnp.tanh(h @ params[f"w{l}"] + params[f"b{l}"])
    return h @ params["w7"] + params["b7"]


if __name__ == "__main__":
    # Small shapes consistent with the module's forward (dense MLP on vectors).
    batch, input_size = 16, 16
    h1 = h2 = h3 = h4 = h5 = h6 = h7 = 32
    output_size = 8

    key = jax.random.PRNGKey(0)
    key, kx = jax.random.split(key)
    x = jax.random.normal(kx, (batch, input_size), jnp.float32)
    params = init_params(key, input_size, h1, h2, h3, h4, h5, h6, h7, output_size)

    ref = deep_net_forward_ref(x, params)

    # Strict f32 path (v5e-friendly elementwise); batch_tile=8 -> 2 grid steps
    # so the multi-step / pipelined path is exercised even at this size.
    out_f32 = jax.block_until_ready(
        deep_net_forward(x, params, batch_tile=8, compute_dtype=jnp.float32))
    assert out_f32.shape == (batch, output_size)
    assert jnp.allclose(out_f32, ref, atol=1e-4, rtol=1e-4), "f32 mismatch vs reference"

    # bf16 matmul inputs + bf16 bias/tanh (v6e/v7x fast path), f32 accumulation;
    # looser tolerance (error compounds over 7 layers in bf16).
    out_bf16 = jax.block_until_ready(
        deep_net_forward(x, params, batch_tile=8, compute_dtype=jnp.bfloat16))
    assert out_bf16.shape == (batch, output_size)
    assert jnp.allclose(out_bf16, ref, atol=5e-2, rtol=5e-2), "bf16 mismatch vs reference"

    print("KERNEL_OK")
</pallas_src>

<mosaic_0001>
module attributes {stable_mosaic.version = 11 : i64} {
  func.func @_deep_net_kernel(%arg0: i32, %arg1: memref<8x16xf32, #tpu.memory_space<vmem>>, %arg2: memref<16x32xf32, #tpu.memory_space<vmem>>, %arg3: memref<1x32xf32, #tpu.memory_space<vmem>>, %arg4: memref<5x32x32xf32, #tpu.memory_space<vmem>>, %arg5: memref<5x1x32xf32, #tpu.memory_space<vmem>>, %arg6: memref<32x8xf32, #tpu.memory_space<vmem>>, %arg7: memref<1x8xf32, #tpu.memory_space<vmem>>, %arg8: memref<8x8xf32, #tpu.memory_space<vmem>>) attributes {dimension_semantics = [#tpu.dimension_semantics<parallel>], iteration_bounds = array<i64: 2>, scalar_prefetch = 0 : i64, scratch_operands = 0 : i64, tpu.core_type = #tpu.core_type<tc>, window_params = [{transform_indices = @transform_0, window_bounds = array<i64: 8, 16>}, {pipeline_mode = #tpu.pipeline_mode<synchronous>, transform_indices = @transform_1, window_bounds = array<i64: 16, 32>}, {pipeline_mode = #tpu.pipeline_mode<synchronous>, transform_indices = @transform_2, window_bounds = array<i64: 1, 32>}, {pipeline_mode = #tpu.pipeline_mode<synchronous>, transform_indices = @transform_3, window_bounds = array<i64: 5, 32, 32>}, {pipeline_mode = #tpu.pipeline_mode<synchronous>, transform_indices = @transform_4, window_bounds = array<i64: 5, 1, 32>}, {pipeline_mode = #tpu.pipeline_mode<synchronous>, transform_indices = @transform_5, window_bounds = array<i64: 32, 8>}, {pipeline_mode = #tpu.pipeline_mode<synchronous>, transform_indices = @transform_6, window_bounds = array<i64: 1, 8>}, {transform_indices = @transform_7, window_bounds = array<i64: 8, 8>}]} {
    %c0 = arith.constant 0 : index
    %c0_0 = arith.constant 0 : index
    %0 = vector.load %arg1[%c0, %c0_0] : memref<8x16xf32, #tpu.memory_space<vmem>>, vector<8x16xf32>
    %c0_1 = arith.constant 0 : index
    %c0_2 = arith.constant 0 : index
    %1 = vector.load %arg2[%c0_1, %c0_2] : memref<16x32xf32, #tpu.memory_space<vmem>>, vector<16x32xf32>
    %c0_3 = arith.constant 0 : index
    %c0_4 = arith.constant 0 : index
    %2 = vector.load %arg3[%c0_3, %c0_4] : memref<1x32xf32, #tpu.memory_space<vmem>>, vector<1x32xf32>
    %cst = arith.constant dense<0.000000e+00> : vector<8x32xf32>
    %3 = tpu.matmul %0, %1, %cst {dimension_numbers = #tpu.dot_dimension_numbers<[1], [0], [0], [1], [0, 0, 1, 1], [], []>} : vector<8x16xf32>, vector<16x32xf32>, vector<8x32xf32> -> vector<8x32xf32>
    %4 = vector.broadcast %2 : vector<1x32xf32> to vector<8x32xf32>
    %5 = arith.addf %3, %4 : vector<8x32xf32>
    %6 = math.tanh %5 : vector<8x32xf32>
    %c0_5 = arith.constant 0 : index
    %c0_6 = arith.constant 0 : index
    %c0_7 = arith.constant 0 : index
    %7 = vector.load %arg4[%c0_5, %c0_6, %c0_7] : memref<5x32x32xf32, #tpu.memory_space<vmem>>, vector<1x32x32xf32>
    %8 = vector.shape_cast %7 : vector<1x32x32xf32> to vector<32x32xf32>
    %c0_8 = arith.constant 0 : index
    %c0_9 = arith.constant 0 : index
    %c0_10 = arith.constant 0 : index
    %9 = vector.load %arg5[%c0_8, %c0_9, %c0_10] : memref<5x1x32xf32, #tpu.memory_space<vmem>>, vector<1x1x32xf32>
    %10 = vector.shape_cast %9 : vector<1x1x32xf32> to vector<1x32xf32>
    %cst_11 = arith.constant dense<0.000000e+00> : vector<8x32xf32>
    %11 = tpu.matmul %6, %8, %cst_11 {dimension_numbers = #tpu.dot_dimension_numbers<[1], [0], [0], [1], [0, 0, 1, 1], [], []>} : vector<8x32xf32>, vector<32x32xf32>, vector<8x32xf32> -> vector<8x32xf32>
    %12 = vector.broadcast %10 : vector<1x32xf32> to vector<8x32xf32>
    %13 = arith.addf %11, %12 : vector<8x32xf32>
    %14 = math.tanh %13 : vector<8x32xf32>
    %c1 = arith.constant 1 : index
    %c0_12 = arith.constant 0 : index
    %c0_13 = arith.constant 0 : index
    %15 = vector.load %arg4[%c1, %c0_12, %c0_13] : memref<5x32x32xf32, #tpu.memory_space<vmem>>, vector<1x32x32xf32>
    %16 = vector.shape_cast %15 : vector<1x32x32xf32> to vector<32x32xf32>
    %c1_14 = arith.constant 1 : index
    %c0_15 = arith.constant 0 : index
    %c0_16 = arith.constant 0 : index
    %17 = vector.load %arg5[%c1_14, %c0_15, %c0_16] : memref<5x1x32xf32, #tpu.memory_space<vmem>>, vector<1x1x32xf32>
    %18 = vector.shape_cast %17 : vector<1x1x32xf32> to vector<1x32xf32>
    %cst_17 = arith.constant dense<0.000000e+00> : vector<8x32xf32>
    %19 = tpu.matmul %14, %16, %cst_17 {dimension_numbers = #tpu.dot_dimension_numbers<[1], [0], [0], [1], [0, 0, 1, 1], [], []>} : vector<8x32xf32>, vector<32x32xf32>, vector<8x32xf32> -> vector<8x32xf32>
    %20 = vector.broadcast %18 : vector<1x32xf32> to vector<8x32xf32>
    %21 = arith.addf %19, %20 : vector<8x32xf32>
    %22 = math.tanh %21 : vector<8x32xf32>
    %c2 = arith.constant 2 : index
    %c0_18 = arith.constant 0 : index
    %c0_19 = arith.constant 0 : index
    %23 = vector.load %arg4[%c2, %c0_18, %c0_19] : memref<5x32x32xf32, #tpu.memory_space<vmem>>, vector<1x32x32xf32>
    %24 = vector.shape_cast %23 : vector<1x32x32xf32> to vector<32x32xf32>
    %c2_20 = arith.constant 2 : index
    %c0_21 = arith.constant 0 : index
    %c0_22 = arith.constant 0 : index
    %25 = vector.load %arg5[%c2_20, %c0_21, %c0_22] : memref<5x1x32xf32, #tpu.memory_space<vmem>>, vector<1x1x32xf32>
    %26 = vector.shape_cast %25 : vector<1x1x32xf32> to vector<1x32xf32>
    %cst_23 = arith.constant dense<0.000000e+00> : vector<8x32xf32>
    %27 = tpu.matmul %22, %24, %cst_23 {dimension_numbers = #tpu.dot_dimension_numbers<[1], [0], [0], [1], [0, 0, 1, 1], [], []>} : vector<8x32xf32>, vector<32x32xf32>, vector<8x32xf32> -> vector<8x32xf32>
    %28 = vector.broadcast %26 : vector<1x32xf32> to vector<8x32xf32>
    %29 = arith.addf %27, %28 : vector<8x32xf32>
    %30 = math.tanh %29 : vector<8x32xf32>
    %c3 = arith.constant 3 : index
    %c0_24 = arith.constant 0 : index
    %c0_25 = arith.constant 0 : index
    %31 = vector.load %arg4[%c3, %c0_24, %c0_25] : memref<5x32x32xf32, #tpu.memory_space<vmem>>, vector<1x32x32xf32>
    %32 = vector.shape_cast %31 : vector<1x32x32xf32> to vector<32x32xf32>
    %c3_26 = arith.constant 3 : index
    %c0_27 = arith.constant 0 : index
    %c0_28 = arith.constant 0 : index
    %33 = vector.load %arg5[%c3_26, %c0_27, %c0_28] : memref<5x1x32xf32, #tpu.memory_space<vmem>>, vector<1x1x32xf32>
    %34 = vector.shape_cast %33 : vector<1x1x32xf32> to vector<1x32xf32>
    %cst_29 = arith.constant dense<0.000000e+00> : vector<8x32xf32>
    %35 = tpu.matmul %30, %32, %cst_29 {dimension_numbers = #tpu.dot_dimension_numbers<[1], [0], [0], [1], [0, 0, 1, 1], [], []>} : vector<8x32xf32>, vector<32x32xf32>, vector<8x32xf32> -> vector<8x32xf32>
    %36 = vector.broadcast %34 : vector<1x32xf32> to vector<8x32xf32>
    %37 = arith.addf %35, %36 : vector<8x32xf32>
    %38 = math.tanh %37 : vector<8x32xf32>
    %c4 = arith.constant 4 : index
    %c0_30 = arith.constant 0 : index
    %c0_31 = arith.constant 0 : index
    %39 = vector.load %arg4[%c4, %c0_30, %c0_31] : memref<5x32x32xf32, #tpu.memory_space<vmem>>, vector<1x32x32xf32>
    %40 = vector.shape_cast %39 : vector<1x32x32xf32> to vector<32x32xf32>
    %c4_32 = arith.constant 4 : index
    %c0_33 = arith.constant 0 : index
    %c0_34 = arith.constant 0 : index
    %41 = vector.load %arg5[%c4_32, %c0_33, %c0_34] : memref<5x1x32xf32, #tpu.memory_space<vmem>>, vector<1x1x32xf32>
    %42 = vector.shape_cast %41 : vector<1x1x32xf32> to vector<1x32xf32>
    %cst_35 = arith.constant dense<0.000000e+00> : vector<8x32xf32>
    %43 = tpu.matmul %38, %40, %cst_35 {dimension_numbers = #tpu.dot_dimension_numbers<[1], [0], [0], [1], [0, 0, 1, 1], [], []>} : vector<8x32xf32>, vector<32x32xf32>, vector<8x32xf32> -> vector<8x32xf32>
    %44 = vector.broadcast %42 : vector<1x32xf32> to vector<8x32xf32>
    %45 = arith.addf %43, %44 : vector<8x32xf32>
    %46 = math.tanh %45 : vector<8x32xf32>
    %c0_36 = arith.constant 0 : index
    %c0_37 = arith.constant 0 : index
    %47 = vector.load %arg6[%c0_36, %c0_37] : memref<32x8xf32, #tpu.memory_space<vmem>>, vector<32x8xf32>
    %cst_38 = arith.constant dense<0.000000e+00> : vector<8x8xf32>
    %48 = tpu.matmul %46, %47, %cst_38 {dimension_numbers = #tpu.dot_dimension_numbers<[1], [0], [0], [1], [0, 0, 1, 1], [], []>} : vector<8x32xf32>, vector<32x8xf32>, vector<8x8xf32> -> vector<8x8xf32>
    %c0_39 = arith.constant 0 : index
    %c0_40 = arith.constant 0 : index
    %49 = vector.load %arg7[%c0_39, %c0_40] : memref<1x8xf32, #tpu.memory_space<vmem>>, vector<1x8xf32>
    %50 = vector.broadcast %49 : vector<1x8xf32> to vector<8x8xf32>
    %51 = arith.addf %48, %50 : vector<8x8xf32>
    %c0_41 = arith.constant 0 : index
    %c0_42 = arith.constant 0 : index
    %52 = vector.load %arg8[%c0_41, %c0_42] : memref<8x8xf32, #tpu.memory_space<vmem>>, vector<8x8xf32>
    tpu.vector_store %arg8[%c0_41, %c0_42], %51 {strides = array<i32>} : memref<8x8xf32, #tpu.memory_space<vmem>>, vector<8x8xf32>,
    return
  }
  func.func @transform_0(%arg0: i32) -> (i32, i32) {
    %c0_i32 = arith.constant 0 : i32
    %c0_i32_0 = arith.constant 0 : i32
    return %arg0, %c0_i32 : i32, i32
  }
  func.func @transform_1(%arg0: i32) -> (i32, i32) {
    %c0_i32 = arith.constant 0 : i32
    %c0_i32_0 = arith.constant 0 : i32
    %c0_i32_1 = arith.constant 0 : i32
    return %c0_i32, %c0_i32_0 : i32, i32
  }
  func.func @transform_2(%arg0: i32) -> (i32, i32) {
    %c0_i32 = arith.constant 0 : i32
    %c0_i32_0 = arith.constant 0 : i32
    %c0_i32_1 = arith.constant 0 : i32
    return %c0_i32, %c0_i32_0 : i32, i32
  }
  func.func @transform_3(%arg0: i32) -> (i32, i32, i32) {
    %c0_i32 = arith.constant 0 : i32
    %c0_i32_0 = arith.constant 0 : i32
    %c0_i32_1 = arith.constant 0 : i32
    %c0_i32_2 = arith.constant 0 : i32
    return %c0_i32, %c0_i32_0, %c0_i32_1 : i32, i32, i32
  }
  func.func @transform_4(%arg0: i32) -> (i32, i32, i32) {
    %c0_i32 = arith.constant 0 : i32
    %c0_i32_0 = arith.constant 0 : i32
    %c0_i32_1 = arith.constant 0 : i32
    %c0_i32_2 = arith.constant 0 : i32
    return %c0_i32, %c0_i32_0, %c0_i32_1 : i32, i32, i32
  }
  func.func @transform_5(%arg0: i32) -> (i32, i32) {
    %c0_i32 = arith.constant 0 : i32
    %c0_i32_0 = arith.constant 0 : i32
    %c0_i32_1 = arith.constant 0 : i32
    return %c0_i32, %c0_i32_0 : i32, i32
  }
  func.func @transform_6(%arg0: i32) -> (i32, i32) {
    %c0_i32 = arith.constant 0 : i32
    %c0_i32_0 = arith.constant 0 : i32
    %c0_i32_1 = arith.constant 0 : i32
    return %c0_i32, %c0_i32_0 : i32, i32
  }
  func.func @transform_7(%arg0: i32) -> (i32, i32) {
    %c0_i32 = arith.constant 0 : i32
    %c0_i32_0 = arith.constant 0 : i32
    return %arg0, %c0_i32 : i32, i32
  }
}

</mosaic_0001>

<llo_original>
// kernel: tpu_custom_call.1
$region0: #{tpu_custom_call.1}
  #allocation0 [shape = 'u32[]', space=smem, size = 0x4, offset = 0x4, fixed_abs, tag = 'smem constant byte address 0x4 - core index']
  #allocation1 [shape = 'u32[144,128]{1,0:T(1,128)}', space=vmem, size = 0x12000, scoped, tag = 'internal scratch']
  %s0 = inlined_call_operand.vmem [shape: f32[16,16], index: 0, kind: input, shape index: {}]
  %s1 = inlined_call_operand.vmem [shape: f32[16,32], index: 1, kind: input, shape index: {}]
  %s2 = inlined_call_operand.vmem [shape: f32[1,32], index: 2, kind: input, shape index: {}]
  %s3 = inlined_call_operand.hbm [shape: f32[5,32,32], index: 3, kind: input, shape index: {}]
  %s4 = inlined_call_operand.vmem [shape: f32[5,1,32], index: 4, kind: input, shape index: {}]
  %s5 = inlined_call_operand.vmem [shape: f32[32,8], index: 5, kind: input, shape index: {}]
  %s6 = inlined_call_operand.vmem [shape: f32[1,8], index: 6, kind: input, shape index: {}]
  %s7 = inlined_call_operand.vmem [shape: f32[16,8], index: 7, kind: output, shape index: {}]
  %s8 = sld [smem:[#allocation0]]
  $region65: #{tpu_custom_call.1} parent=0
    _
  %s10 = ssub.s32 1, %s8
  %s11 = scalar_select 0, %s10, %s8
  $region1: #{tpu_custom_call.1} parent=0
    #allocation2 [shape = 'u8[81920]{0}', space=vmem, size = 0x14000, scoped, tag = 'input window, operand 3, single buffered']
    #allocation3 [shape = 's32[2]{0}', space=sflag, size = 0x8, scoped, tag = 'scoped memory for tpu_custom_call.1']
    %12 = vsyncpa [#allocation3], 0
    loop: start=0, step=1, limit=4
    $region2: #{tpu_custom_call.1} parent=1 // loop_pre_header
      _
    $region3: #{tpu_custom_call.1} parent=1 // loop_header
      %s14 = sphi 0, %s18
      %p15 = scmp.ge.s32.totalorder %s14, 4
      %s24 = sphi 0, %s26
      %s27 = sphi 0, %s24
      %s28 = sphi 0, %s27
      %s44 = sphi 0, %s28
      %s48 = sphi 0, %s48
      %s50 = sphi 0, %s48
      %s51 = sphi 0, %s50
      %s65 = sphi 0, %s51
      %s69 = sphi 0, %s69
      %s71 = sphi 0, %s69
      %s72 = sphi 0, %s71
      %s86 = sphi 0, %s72
      %s90 = sphi 0, %s90
      %s92 = sphi 0, %s90
      %s93 = sphi 0, %s92
      %s107 = sphi 0, %s93
      %s111 = sphi 0, %s111
      %s113 = sphi 0, %s111
      %s114 = sphi 0, %s113
      %s128 = sphi 0, %s114
      %s132 = sphi 0, %s132
      %s134 = sphi 0, %s132
      %s135 = sphi 0, %s134
      %s149 = sphi 0, %s135
      %s153 = sphi 0, %s153
      %s155 = sphi 0, %s153
      %s156 = sphi 0, %s155
      %s170 = sphi 0, %s156
      %s176 = sphi 0, %s178
      %s179 = sphi 0, %s176
      %s180 = sphi 0, %s179
      %s196 = sphi 0, %s180
    $region4: #{tpu_custom_call.1} parent=1 // loop_header_branch
      %17 = sbr.rel (%p15) target = $region8
    $region5: #{tpu_custom_call.1} parent=1 // loop_body
      %s19 = ssub.s32 %s14, 1
      %s20 = ssub.s32 %s14, 2
      %s21 = sadd.s32 %s14, 1
      %s22 = ssub.s32 %s14, %s21
      %p23 = scmp.eq.s32.totalorder %s22, 0
      %s25 = sadd.s32 %s24, 1
      %s26 = scalar_select %p23, %s24, %s25
      %p29 = pneg %p23
      %p30 = scmp.eq.s32.totalorder %s14, 1
      %p31 = por %p29, %p30
      %p32 = scmp.ne.s32.totalorder %s24, %s27
      %p33 = scmp.eq.s32.totalorder %s14, 0
      %p34 = por %p32, %p33
      %p35 = scmp.ne.s32.totalorder %s24, %s27
      %p36 = scmp.eq.s32.totalorder %s19, 1
      %p37 = por %p35, %p36
      %p38 = scmp.ne.s32.totalorder %s27, %s28
      %p39 = scmp.eq.s32.totalorder %s19, 0
      %p40 = por %p38, %p39
      %p41 = scmp.ne.s32.totalorder %s27, %s28
      %p42 = scmp.eq.s32.totalorder %s20, 1
      %p43 = por %p41, %p42
      %p45 = scmp.ne.s32.totalorder %s28, %s44
      %p46 = scmp.eq.s32.totalorder %s20, 0
      %p47 = por %p45, %p46
      %s49 = sadd.s32 %s48, 1
      %p52 = scmp.eq.s32.totalorder %s14, 1
      %p53 = scmp.ne.s32.totalorder %s48, %s50
      %p54 = scmp.eq.s32.totalorder %s14, 0
      %p55 = por %p53, %p54
      %p56 = scmp.ne.s32.totalorder %s48, %s50
      %p57 = scmp.eq.s32.totalorder %s19, 1
      %p58 = por %p56, %p57
      %p59 = scmp.ne.s32.totalorder %s50, %s51
      %p60 = scmp.eq.s32.totalorder %s19, 0
      %p61 = por %p59, %p60
      %p62 = scmp.ne.s32.totalorder %s50, %s51
      %p63 = scmp.eq.s32.totalorder %s20, 1
      %p64 = por %p62, %p63
      %p66 = scmp.ne.s32.totalorder %s51, %s65
      %p67 = scmp.eq.s32.totalorder %s20, 0
      %p68 = por %p66, %p67
      %s70 = sadd.s32 %s69, 1
      %p73 = scmp.eq.s32.totalorder %s14, 1
      %p74 = scmp.ne.s32.totalorder %s69, %s71
      %p75 = scmp.eq.s32.totalorder %s14, 0
      %p76 = por %p74, %p75
      %p77 = scmp.ne.s32.totalorder %s69, %s71
      %p78 = scmp.eq.s32.totalorder %s19, 1
      %p79 = por %p77, %p78
      %p80 = scmp.ne.s32.totalorder %s71, %s72
      %p81 = scmp.eq.s32.totalorder %s19, 0
      %p82 = por %p80, %p81
      %p83 = scmp.ne.s32.totalorder %s71, %s72
      %p84 = scmp.eq.s32.totalorder %s20, 1
      %p85 = por %p83, %p84
      %p87 = scmp.ne.s32.totalorder %s72, %s86
      %p88 = scmp.eq.s32.totalorder %s20, 0
      %p89 = por %p87, %p88
      %s91 = sadd.s32 %s90, 1
      %p94 = scmp.eq.s32.totalorder %s14, 1
      %p95 = scmp.ne.s32.totalorder %s90, %s92
      %p96 = scmp.eq.s32.totalorder %s14, 0
      %p97 = por %p95, %p96
      %p98 = scmp.ne.s32.totalorder %s90, %s92
      %p99 = scmp.eq.s32.totalorder %s19, 1
      %p100 = por %p98, %p99
      %p101 = scmp.ne.s32.totalorder %s92, %s93
      %p102 = scmp.eq.s32.totalorder %s19, 0
      %p103 = por %p101, %p102
      %p104 = scmp.ne.s32.totalorder %s92, %s93
      %p105 = scmp.eq.s32.totalorder %s20, 1
      %p106 = por %p104, %p105
      %p108 = scmp.ne.s32.totalorder %s93, %s107
      %p109 = scmp.eq.s32.totalorder %s20, 0
      %p110 = por %p108, %p109
      %s112 = sadd.s32 %s111, 1
      %p115 = scmp.eq.s32.totalorder %s14, 1
      %p116 = scmp.ne.s32.totalorder %s111, %s113
      %p117 = scmp.eq.s32.totalorder %s14, 0
      %p118 = por %p116, %p117
      %p119 = scmp.ne.s32.totalorder %s111, %s113
      %p120 = scmp.eq.s32.totalorder %s19, 1
      %p121 = por %p119, %p120
      %p122 = scmp.ne.s32.totalorder %s113, %s114
      %p123 = scmp.eq.s32.totalorder %s19, 0
      %p124 = por %p122, %p123
      %p125 = scmp.ne.s32.totalorder %s113, %s114
      %p126 = scmp.eq.s32.totalorder %s20, 1
      %p127 = por %p125, %p126
      %p129 = scmp.ne.s32.totalorder %s114, %s128
      %p130 = scmp.eq.s32.totalorder %s20, 0
      %p131 = por %p129, %p130
      %s133 = sadd.s32 %s132, 1
      %p136 = scmp.eq.s32.totalorder %s14, 1
      %p137 = scmp.ne.s32.totalorder %s132, %s134
      %p138 = scmp.eq.s32.totalorder %s14, 0
      %p139 = por %p137, %p138
      %p140 = scmp.ne.s32.totalorder %s132, %s134
      %p141 = scmp.eq.s32.totalorder %s19, 1
      %p142 = por %p140, %p141
      %p143 = scmp.ne.s32.totalorder %s134, %s135
      %p144 = scmp.eq.s32.totalorder %s19, 0
      %p145 = por %p143, %p144
      %p146 = scmp.ne.s32.totalorder %s134, %s135
      %p147 = scmp.eq.s32.totalorder %s20, 1
      %p148 = por %p146, %p147
      %p150 = scmp.ne.s32.totalorder %s135, %s149
      %p151 = scmp.eq.s32.totalorder %s20, 0
      %p152 = por %p150, %p151
      %s154 = sadd.s32 %s153, 1
      %p157 = scmp.eq.s32.totalorder %s14, 1
      %p158 = scmp.ne.s32.totalorder %s153, %s155
      %p159 = scmp.eq.s32.totalorder %s14, 0
      %p160 = por %p158, %p159
      %p161 = scmp.ne.s32.totalorder %s153, %s155
      %p162 = scmp.eq.s32.totalorder %s19, 1
      %p163 = por %p161, %p162
      %p164 = scmp.ne.s32.totalorder %s155, %s156
      %p165 = scmp.eq.s32.totalorder %s19, 0
      %p166 = por %p164, %p165
      %p167 = scmp.ne.s32.totalorder %s155, %s156
      %p168 = scmp.eq.s32.totalorder %s20, 1
      %p169 = por %p167, %p168
      %p171 = scmp.ne.s32.totalorder %s156, %s170
      %p172 = scmp.eq.s32.totalorder %s20, 0
      %p173 = por %p171, %p172
      %s174 = ssub.s32 %s14, %s21
      %p175 = scmp.eq.s32.totalorder %s174, 0
      %s177 = sadd.s32 %s176, 1
      %s178 = scalar_select %p175, %s176, %s177
      %p181 = pneg %p175
      %p182 = scmp.eq.s32.totalorder %s14, 1
      %p183 = por %p181, %p182
      %p184 = scmp.ne.s32.totalorder %s176, %s179
      %p185 = scmp.eq.s32.totalorder %s14, 0
      %p186 = por %p184, %p185
      %p187 = scmp.ne.s32.totalorder %s176, %s179
      %p188 = scmp.eq.s32.totalorder %s19, 1
      %p189 = por %p187, %p188
      %p190 = scmp.ne.s32.totalorder %s179, %s180
      %p191 = scmp.eq.s32.totalorder %s19, 0
      %p192 = por %p190, %p191
      %p193 = scmp.ne.s32.totalorder %s179, %s180
      %p194 = scmp.eq.s32.totalorder %s20, 1
      %p195 = por %p193, %p194
      %p197 = scmp.ne.s32.totalorder %s180, %s196
      %p198 = scmp.eq.s32.totalorder %s20, 0
      %p199 = por %p197, %p198
      %p200 = scmp.le.s32.totalorder 1, %s14
      %p201 = scmp.lt.s32.totalorder %s14, 3
      %p202 = pnand %p200, %p201
      %p203 = pneg %p202
      // Predicated region
      $region9: #{tpu_custom_call.1} parent=5 // pred_check
        _
      $region10: #{tpu_custom_call.1} parent=5 // pred_check_branch
        %205 = sbr.rel (%p202) target = $region12
      $region11: #{tpu_custom_call.1} parent=5 // pred_region
        %s206 = ssub.s32 %s14, 1
        // Predicated region
        $region13: #{tpu_custom_call.1} parent=11 // pred_check
          %p207 = pneg %p61
        $region14: #{tpu_custom_call.1} parent=11 // pred_check_branch
          %209 = sbr.rel (%p207) target = $region16
        $region15: #{tpu_custom_call.1} parent=11 // pred_region
          _
        $region16: #{tpu_custom_call.1} parent=11 // pred_fallthru
          _
        // Predicated region
        $region17: #{tpu_custom_call.1} parent=11 // pred_check
          %p210 = pneg %p82
        $region18: #{tpu_custom_call.1} parent=11 // pred_check_branch
          %212 = sbr.rel (%p210) target = $region20
        $region19: #{tpu_custom_call.1} parent=11 // pred_region
          _
        $region20: #{tpu_custom_call.1} parent=11 // pred_fallthru
          _
        // Predicated region
        $region21: #{tpu_custom_call.1} parent=11 // pred_check
          %p213 = pneg %p103
        $region22: #{tpu_custom_call.1} parent=11 // pred_check_branch
          %215 = sbr.rel (%p213) target = $region24
        $region23: #{tpu_custom_call.1} parent=11 // pred_region
          %s217 = ssub.s32 2560, 2560
          %218 = vsyncadd [#allocation3], %s217
          %s219 = sshll.u32 [#allocation2], 4
          %s220 = int_to_ptr.vmem [resolvable:$true] %s219
          %225 = dma.hbm_to_vmem [thread:$0]  %s3, 2560, %s220, [#allocation3], 128, 128, 8
        $region24: #{tpu_custom_call.1} parent=11 // pred_fallthru
          _
        // Predicated region
        $region25: #{tpu_custom_call.1} parent=11 // pred_check
          %p226 = pneg %p124
        $region26: #{tpu_custom_call.1} parent=11 // pred_check_branch
          %228 = sbr.rel (%p226) target = $region28
        $region27: #{tpu_custom_call.1} parent=11 // pred_region
          _
        $region28: #{tpu_custom_call.1} parent=11 // pred_fallthru
          _
        // Predicated region
        $region29: #{tpu_custom_call.1} parent=11 // pred_check
          %p229 = pneg %p145
        $region30: #{tpu_custom_call.1} parent=11 // pred_check_branch
          %231 = sbr.rel (%p229) target = $region32
        $region31: #{tpu_custom_call.1} parent=11 // pred_region
          _
        $region32: #{tpu_custom_call.1} parent=11 // pred_fallthru
          _
        // Predicated region
        $region33: #{tpu_custom_call.1} parent=11 // pred_check
          %p232 = pneg %p166
        $region34: #{tpu_custom_call.1} parent=11 // pred_check_branch
          %234 = sbr.rel (%p232) target = $region36
        $region35: #{tpu_custom_call.1} parent=11 // pred_region
          _
        $region36: #{tpu_custom_call.1} parent=11 // pred_fallthru
          _
      $region12: #{tpu_custom_call.1} parent=5 // pred_fallthru
        _
      %p235 = scmp.lt.s32.totalorder %s14, 2
      // Predicated region
      $region37: #{tpu_custom_call.1} parent=5 // pred_check
        %p236 = pneg %p235
      $region38: #{tpu_custom_call.1} parent=5 // pred_check_branch
        %238 = sbr.rel (%p236) target = $region40
      $region39: #{tpu_custom_call.1} parent=5 // pred_region
        // Predicated region
        $region41: #{tpu_custom_call.1} parent=39 // pred_check
          %p239 = pneg %p34
        $region42: #{tpu_custom_call.1} parent=39 // pred_check_branch
          %241 = sbr.rel (%p239) target = $region44
        $region43: #{tpu_custom_call.1} parent=39 // pred_region
          %p242 = scmp.lt.s32.totalorder %s14, 1
          %s243 = scalar_select %p242, %s14, 1
          %s244 = smul.addr %s243, 8
          %s245 = scalar_lea.vmem %s0, %s244
        $region44: #{tpu_custom_call.1} parent=39 // pred_fallthru
          _
      $region40: #{tpu_custom_call.1} parent=5 // pred_fallthru
        _
      %p246 = scmp.le.s32.totalorder 1, %s14
      %p247 = scmp.lt.s32.totalorder %s14, 3
      %p248 = pnand %p246, %p247
      %p249 = pneg %p248
      // Predicated region
      $region45: #{tpu_custom_call.1} parent=5 // pred_check
        _
      $region46: #{tpu_custom_call.1} parent=5 // pred_check_branch
        %251 = sbr.rel (%p248) target = $region48
      $region47: #{tpu_custom_call.1} parent=5 // pred_region
        %s252 = ssub.s32 %s14, 1
        // Predicated region
        $region49: #{tpu_custom_call.1} parent=47 // pred_check
          %p253 = pneg %p103
        $region50: #{tpu_custom_call.1} parent=47 // pred_check_branch
          %255 = sbr.rel (%p253) target = $region52
        $region51: #{tpu_custom_call.1} parent=47 // pred_region
          %256 = dma.done [#allocation3], 2560
        $region52: #{tpu_custom_call.1} parent=47 // pred_fallthru
          _
        %p257 = scmp.lt.s32.totalorder %s19, 1
        %s258 = scalar_select %p257, %s19, 1
        %s259 = smul.addr %s258, 8
        %s260 = scalar_lea.vmem %s0, %s259
        %p261 = pneg %p40
        %p262 = pneg %p37
        %p263 = pneg %p61
        %p264 = pneg %p58
        %p265 = pneg %p82
        %p266 = pneg %p79
        %p267 = pneg %p103
        %p268 = pneg %p100
        %p269 = pneg %p124
        %p270 = pneg %p121
        %p271 = pneg %p145
        %p272 = pneg %p142
        %p273 = pneg %p166
        %p274 = pneg %p163
        %p275 = pneg %p192
        %p276 = pneg %p189
        %p277 = scmp.lt.s32.totalorder %s19, 1
        %s278 = scalar_select %p277, %s19, 1
        %s279 = smul.addr %s278, 8
        %s280 = scalar_lea.vmem %s7, %s279
        %p281 = scmp.lt.s32.totalorder %s19, 1
        %s282 = scalar_select %p281, %s19, 1
        %s283 = smul.addr %s282, 8
        %s284 = scalar_lea.vmem %s0, %s283
        %p285 = scmp.lt.s32.totalorder %s19, 1
        %s286 = scalar_select %p285, %s19, 1
        %s287 = smul.addr %s286, 8
        %s288 = scalar_lea.vmem %s7, %s287
        %v289 = vld [vmem:[%s284] sm:$0xff]
        %v290 = vld [vmem:[%s1] sm:$0xff]
        %v291 = vld [vmem:[%s1 + $0x8] sm:$0xff]
        %v292 = vld [vmem:[%s2] sm:$0x1]
        %v294 = vlaneseq
        %v295 = vshrl.u32 %v294, 7
        %v296 = vsub.s32 0, %v295
        %v297 = vrot.slane %v292, %v296
        %vm299 = vcmask 130048
        %v301 = vsel %vm299, %v289, 0
        %303 = vmatprep.subr.mxu0 0.0
        %304 = vmatpush1.msra.mxu0 0.0
        %305 = vmatprep.subr.mxu0 0.0
        %306 = vmatpush1.msra.mxu0 0.0
        %307 = vmatprep.subr.mxu0 0.0
        %308 = vmatpush1.msra.mxu0 0.0
        %309 = vmatprep.subr.mxu0 0.0
        %310 = vmatpush1.msra.mxu0 0.0
        %311 = vmatprep.subr.mxu0 0.0
        %312 = vmatpush1.msra.mxu0 0.0
        %313 = vmatprep.subr.mxu0 0.0
        %314 = vmatpush1.msra.mxu0 0.0
        %315 = vmatprep.subr.mxu0 0.0
        %316 = vmatpush1.msra.mxu0 0.0
        %317 = vmatprep.subr.mxu0 0.0
        %318 = vmatpush1.msra.mxu0 0.0
        %319 = vmatprep.subr.mxu0 0.0
        %320 = vmatpush1.msra.mxu0 0.0
        %321 = vmatprep.subr.mxu0 0.0
        %322 = vmatpush1.msra.mxu0 0.0
        %323 = vmatprep.subr.mxu0 0.0
        %324 = vmatpush1.msra.mxu0 0.0
        %325 = vmatprep.subr.mxu0 0.0
        %326 = vmatpush1.msra.mxu0 0.0
        %327 = vmatprep.subr.mxu0 0.0
        %328 = vmatpush1.msra.mxu0 0.0
        %329 = vmatprep.subr.mxu0 0.0
        %330 = vmatpush1.msra.mxu0 0.0
        %331 = vmatprep.subr.mxu0 0.0
        %332 = vmatpush1.msra.mxu0 %v291
        %333 = vmatprep.subr.mxu0 0.0
        %334 = vmatpush1.msra.mxu0 %v290
        %335 = vmatprep.subr.mxu0 0.0
        %336 = vmatpush2.msra.mxu0 0.0
        %337 = vmatprep.subr.mxu0 0.0
        %338 = vmatpush2.msra.mxu0 0.0
        %339 = vmatprep.subr.mxu0 0.0
        %340 = vmatpush2.msra.mxu0 0.0
        %341 = vmatprep.subr.mxu0 0.0
        %342 = vmatpush2.msra.mxu0 0.0
        %343 = vmatprep.subr.mxu0 0.0
        %344 = vmatpush2.msra.mxu0 0.0
        %345 = vmatprep.subr.mxu0 0.0
        %346 = vmatpush2.msra.mxu0 0.0
        %347 = vmatprep.subr.mxu0 0.0
        %348 = vmatpush2.msra.mxu0 0.0
        %349 = vmatprep.subr.mxu0 0.0
        %350 = vmatpush2.msra.mxu0 0.0
        %351 = vmatprep.subr.mxu0 0.0
        %352 = vmatpush2.msra.mxu0 0.0
        %353 = vmatprep.subr.mxu0 0.0
        %354 = vmatpush2.msra.mxu0 0.0
        %355 = vmatprep.subr.mxu0 0.0
        %356 = vmatpush2.msra.mxu0 0.0
        %357 = vmatprep.subr.mxu0 0.0
        %358 = vmatpush2.msra.mxu0 0.0
        %359 = vmatprep.subr.mxu0 0.0
        %360 = vmatpush2.msra.mxu0 0.0
        %361 = vmatprep.subr.mxu0 0.0
        %362 = vmatpush2.msra.mxu0 0.0
        %363 = vmatprep.subr.mxu0 0.0
        %364 = vmatpush2.msra.mxu0 0.0
        %365 = vmatprep.subr.mxu0 0.0
        %366 = vmatpush2.msra.mxu0 0.0
        %367 = vmatprep.mubr.f32.mxu0 0.0
        %368 = vmatmul.mubr.f32.gmra.mxu0 %v301
        %v369 = vpop.f32.mrf.mxu0
        %v370 = vadd.f32 %v297, %v369
        %v371 = vpop.f32.mrf.mxu0
        %372 = vdwg.mxu0
        %v373 = vtanh.pop %v370
        %v374 = vld [vmem:[#allocation2] sm:$0xff]
        %v375 = vld [vmem:[#allocation2 + $0x8] sm:$0xff]
        %v376 = vld [vmem:[#allocation2 + $0x10] sm:$0xff]
        %v377 = vld [vmem:[#allocation2 + $0x18] sm:$0xff]
        %v378 = vld [vmem:[%s4] sm:$0x1]
        %v380 = vlaneseq
        %v381 = vshrl.u32 %v380, 7
        %v382 = vsub.s32 0, %v381
        %v383 = vrot.slane %v378, %v382
        %vm385 = vcmask 261120
        %v387 = vsel %vm385, %v373, 0
        %389 = vmatprep.subr.mxu0 0.0
        %390 = vmatpush1.msra.mxu0 0.0
        %391 = vmatprep.subr.mxu0 0.0
        %392 = vmatpush1.msra.mxu0 0.0
        %393 = vmatprep.subr.mxu0 0.0
        %394 = vmatpush1.msra.mxu0 0.0
        %395 = vmatprep.subr.mxu0 0.0
        %396 = vmatpush1.msra.mxu0 0.0
        %397 = vmatprep.subr.mxu0 0.0
        %398 = vmatpush1.msra.mxu0 0.0
        %399 = vmatprep.subr.mxu0 0.0
        %400 = vmatpush1.msra.mxu0 0.0
        %401 = vmatprep.subr.mxu0 0.0
        %402 = vmatpush1.msra.mxu0 0.0
        %403 = vmatprep.subr.mxu0 0.0
        %404 = vmatpush1.msra.mxu0 0.0
        %405 = vmatprep.subr.mxu0 0.0
        %406 = vmatpush1.msra.mxu0 0.0
        %407 = vmatprep.subr.mxu0 0.0
        %408 = vmatpush1.msra.mxu0 0.0
        %409 = vmatprep.subr.mxu0 0.0
        %410 = vmatpush1.msra.mxu0 0.0
        %411 = vmatprep.subr.mxu0 0.0
        %412 = vmatpush1.msra.mxu0 0.0
        %413 = vmatprep.subr.mxu0 0.0
        %414 = vmatpush1.msra.mxu0 %v377
        %415 = vmatprep.subr.mxu0 0.0
        %416 = vmatpush1.msra.mxu0 %v376
        %417 = vmatprep.subr.mxu0 0.0
        %418 = vmatpush1.msra.mxu0 %v375
        %419 = vmatprep.subr.mxu0 0.0
        %420 = vmatpush1.msra.mxu0 %v374
        %421 = vmatprep.subr.mxu0 0.0
        %422 = vmatpush2.msra.mxu0 0.0
        %423 = vmatprep.subr.mxu0 0.0
        %424 = vmatpush2.msra.mxu0 0.0
        %425 = vmatprep.subr.mxu0 0.0
        %426 = vmatpush2.msra.mxu0 0.0
        %427 = vmatprep.subr.mxu0 0.0
        %428 = vmatpush2.msra.mxu0 0.0
        %429 = vmatprep.subr.mxu0 0.0
        %430 = vmatpush2.msra.mxu0 0.0
        %431 = vmatprep.subr.mxu0 0.0
        %432 = vmatpush2.msra.mxu0 0.0
        %433 = vmatprep.subr.mxu0 0.0
        %434 = vmatpush2.msra.mxu0 0.0
        %435 = vmatprep.subr.mxu0 0.0
        %436 = vmatpush2.msra.mxu0 0.0
        %437 = vmatprep.subr.mxu0 0.0
        %438 = vmatpush2.msra.mxu0 0.0
        %439 = vmatprep.subr.mxu0 0.0
        %440 = vmatpush2.msra.mxu0 0.0
        %441 = vmatprep.subr.mxu0 0.0
        %442 = vmatpush2.msra.mxu0 0.0
        %443 = vmatprep.subr.mxu0 0.0
        %444 = vmatpush2.msra.mxu0 0.0
        %445 = vmatprep.subr.mxu0 0.0
        %446 = vmatpush2.msra.mxu0 0.0
        %447 = vmatprep.subr.mxu0 0.0
        %448 = vmatpush2.msra.mxu0 0.0
        %449 = vmatprep.subr.mxu0 0.0
        %450 = vmatpush2.msra.mxu0 0.0
        %451 = vmatprep.subr.mxu0 0.0
        %452 = vmatpush2.msra.mxu0 0.0
        %453 = vmatprep.mubr.f32.mxu0 0.0
        %454 = vmatmul.mubr.f32.gmra.mxu0 %v387
        %v455 = vpop.f32.mrf.mxu0
        %v456 = vadd.f32 %v383, %v455
        %v457 = vpop.f32.mrf.mxu0
        %458 = vdwg.mxu0
        %v459 = vtanh.pop %v456
        %s460 = scalar_lea.vmem [#allocation2], 32
        %v461 = vld [vmem:[%s460] sm:$0xff]
        %v462 = vld [vmem:[%s460 + $0x8] sm:$0xff]
        %v463 = vld [vmem:[%s460 + $0x10] sm:$0xff]
        %v464 = vld [vmem:[%s460 + $0x18] sm:$0xff]
        %s465 = scalar_lea.vmem %s4, 1
        %v466 = vld [vmem:[%s465] sm:$0x1]
        %v468 = vlaneseq
        %v469 = vshrl.u32 %v468, 7
        %v470 = vsub.s32 0, %v469
        %v471 = vrot.slane %v466, %v470
        %v474 = vsel %vm385, %v459, 0
        %476 = vmatprep.subr.mxu0 0.0
        %477 = vmatpush1.msra.mxu0 0.0
        %478 = vmatprep.subr.mxu0 0.0
        %479 = vmatpush1.msra.mxu0 0.0
        %480 = vmatprep.subr.mxu0 0.0
        %481 = vmatpush1.msra.mxu0 0.0
        %482 = vmatprep.subr.mxu0 0.0
        %483 = vmatpush1.msra.mxu0 0.0
        %484 = vmatprep.subr.mxu0 0.0
        %485 = vmatpush1.msra.mxu0 0.0
        %486 = vmatprep.subr.mxu0 0.0
        %487 = vmatpush1.msra.mxu0 0.0
        %488 = vmatprep.subr.mxu0 0.0
        %489 = vmatpush1.msra.mxu0 0.0
        %490 = vmatprep.subr.mxu0 0.0
        %491 = vmatpush1.msra.mxu0 0.0
        %492 = vmatprep.subr.mxu0 0.0
        %493 = vmatpush1.msra.mxu0 0.0
        %494 = vmatprep.subr.mxu0 0.0
        %495 = vmatpush1.msra.mxu0 0.0
        %496 = vmatprep.subr.mxu0 0.0
        %497 = vmatpush1.msra.mxu0 0.0
        %498 = vmatprep.subr.mxu0 0.0
        %499 = vmatpush1.msra.mxu0 0.0
        %500 = vmatprep.subr.mxu0 0.0
        %501 = vmatpush1.msra.mxu0 %v464
        %502 = vmatprep.subr.mxu0 0.0
        %503 = vmatpush1.msra.mxu0 %v463
        %504 = vmatprep.subr.mxu0 0.0
        %505 = vmatpush1.msra.mxu0 %v462
        %506 = vmatprep.subr.mxu0 0.0
        %507 = vmatpush1.msra.mxu0 %v461
        %508 = vmatprep.subr.mxu0 0.0
        %509 = vmatpush2.msra.mxu0 0.0
        %510 = vmatprep.subr.mxu0 0.0
        %511 = vmatpush2.msra.mxu0 0.0
        %512 = vmatprep.subr.mxu0 0.0
        %513 = vmatpush2.msra.mxu0 0.0
        %514 = vmatprep.subr.mxu0 0.0
        %515 = vmatpush2.msra.mxu0 0.0
        %516 = vmatprep.subr.mxu0 0.0
        %517 = vmatpush2.msra.mxu0 0.0
        %518 = vmatprep.subr.mxu0 0.0
        %519 = vmatpush2.msra.mxu0 0.0
        %520 = vmatprep.subr.mxu0 0.0
        %521 = vmatpush2.msra.mxu0 0.0
        %522 = vmatprep.subr.mxu0 0.0
        %523 = vmatpush2.msra.mxu0 0.0
        %524 = vmatprep.subr.mxu0 0.0
        %525 = vmatpush2.msra.mxu0 0.0
        %526 = vmatprep.subr.mxu0 0.0
        %527 = vmatpush2.msra.mxu0 0.0
        %528 = vmatprep.subr.mxu0 0.0
        %529 = vmatpush2.msra.mxu0 0.0
        %530 = vmatprep.subr.mxu0 0.0
        %531 = vmatpush2.msra.mxu0 0.0
        %532 = vmatprep.subr.mxu0 0.0
        %533 = vmatpush2.msra.mxu0 0.0
        %534 = vmatprep.subr.mxu0 0.0
        %535 = vmatpush2.msra.mxu0 0.0
        %536 = vmatprep.subr.mxu0 0.0
        %537 = vmatpush2.msra.mxu0 0.0
        %538 = vmatprep.subr.mxu0 0.0
        %539 = vmatpush2.msra.mxu0 0.0
        %540 = vmatprep.mubr.f32.mxu0 0.0
        %541 = vmatmul.mubr.f32.gmra.mxu0 %v474
        %v542 = vpop.f32.mrf.mxu0
        %v543 = vadd.f32 %v471, %v542
        %v544 = vpop.f32.mrf.mxu0
        %545 = vdwg.mxu0
        %v546 = vtanh.pop %v543
        %s547 = scalar_lea.vmem [#allocation2], 64
        %v548 = vld [vmem:[%s547] sm:$0xff]
        %v549 = vld [vmem:[%s547 + $0x8] sm:$0xff]
        %v550 = vld [vmem:[%s547 + $0x10] sm:$0xff]
        %v551 = vld [vmem:[%s547 + $0x18] sm:$0xff]
        %s552 = scalar_lea.vmem %s4, 2
        %v553 = vld [vmem:[%s552] sm:$0x1]
        %v555 = vlaneseq
        %v556 = vshrl.u32 %v555, 7
        %v557 = vsub.s32 0, %v556
        %v558 = vrot.slane %v553, %v557
        %v561 = vsel %vm385, %v546, 0
        %563 = vmatprep.subr.mxu0 0.0
        %564 = vmatpush1.msra.mxu0 0.0
        %565 = vmatprep.subr.mxu0 0.0
        %566 = vmatpush1.msra.mxu0 0.0
        %567 = vmatprep.subr.mxu0 0.0
        %568 = vmatpush1.msra.mxu0 0.0
        %569 = vmatprep.subr.mxu0 0.0
        %570 = vmatpush1.msra.mxu0 0.0
        %571 = vmatprep.subr.mxu0 0.0
        %572 = vmatpush1.msra.mxu0 0.0
        %573 = vmatprep.subr.mxu0 0.0
        %574 = vmatpush1.msra.mxu0 0.0
        %575 = vmatprep.subr.mxu0 0.0
        %576 = vmatpush1.msra.mxu0 0.0
        %577 = vmatprep.subr.mxu0 0.0
        %578 = vmatpush1.msra.mxu0 0.0
        %579 = vmatprep.subr.mxu0 0.0
        %580 = vmatpush1.msra.mxu0 0.0
        %581 = vmatprep.subr.mxu0 0.0
        %582 = vmatpush1.msra.mxu0 0.0
        %583 = vmatprep.subr.mxu0 0.0
        %584 = vmatpush1.msra.mxu0 0.0
        %585 = vmatprep.subr.mxu0 0.0
        %586 = vmatpush1.msra.mxu0 0.0
        %587 = vmatprep.subr.mxu0 0.0
        %588 = vmatpush1.msra.mxu0 %v551
        %589 = vmatprep.subr.mxu0 0.0
        %590 = vmatpush1.msra.mxu0 %v550
        %591 = vmatprep.subr.mxu0 0.0
        %592 = vmatpush1.msra.mxu0 %v549
        %593 = vmatprep.subr.mxu0 0.0
        %594 = vmatpush1.msra.mxu0 %v548
        %595 = vmatprep.subr.mxu0 0.0
        %596 = vmatpush2.msra.mxu0 0.0
        %597 = vmatprep.subr.mxu0 0.0
        %598 = vmatpush2.msra.mxu0 0.0
        %599 = vmatprep.subr.mxu0 0.0
        %600 = vmatpush2.msra.mxu0 0.0
        %601 = vmatprep.subr.mxu0 0.0
        %602 = vmatpush2.msra.mxu0 0.0
        %603 = vmatprep.subr.mxu0 0.0
        %604 = vmatpush2.msra.mxu0 0.0
        %605 = vmatprep.subr.mxu0 0.0
        %606 = vmatpush2.msra.mxu0 0.0
        %607 = vmatprep.subr.mxu0 0.0
        %608 = vmatpush2.msra.mxu0 0.0
        %609 = vmatprep.subr.mxu0 0.0
        %610 = vmatpush2.msra.mxu0 0.0
        %611 = vmatprep.subr.mxu0 0.0
        %612 = vmatpush2.msra.mxu0 0.0
        %613 = vmatprep.subr.mxu0 0.0
        %614 = vmatpush2.msra.mxu0 0.0
        %615 = vmatprep.subr.mxu0 0.0
        %616 = vmatpush2.msra.mxu0 0.0
        %617 = vmatprep.subr.mxu0 0.0
        %618 = vmatpush2.msra.mxu0 0.0
        %619 = vmatprep.subr.mxu0 0.0
        %620 = vmatpush2.msra.mxu0 0.0
        %621 = vmatprep.subr.mxu0 0.0
        %622 = vmatpush2.msra.mxu0 0.0
        %623 = vmatprep.subr.mxu0 0.0
        %624 = vmatpush2.msra.mxu0 0.0
        %625 = vmatprep.subr.mxu0 0.0
        %626 = vmatpush2.msra.mxu0 0.0
        %627 = vmatprep.mubr.f32.mxu0 0.0
        %628 = vmatmul.mubr.f32.gmra.mxu0 %v561
        %v629 = vpop.f32.mrf.mxu0
        %v630 = vadd.f32 %v558, %v629
        %v631 = vpop.f32.mrf.mxu0
        %632 = vdwg.mxu0
        %v633 = vtanh.pop %v630
        %s634 = scalar_lea.vmem [#allocation2], 96
        %v635 = vld [vmem:[%s634] sm:$0xff]
        %v636 = vld [vmem:[%s634 + $0x8] sm:$0xff]
        %v637 = vld [vmem:[%s634 + $0x10] sm:$0xff]
        %v638 = vld [vmem:[%s634 + $0x18] sm:$0xff]
        %s639 = scalar_lea.vmem %s4, 3
        %v640 = vld [vmem:[%s639] sm:$0x1]
        %v642 = vlaneseq
        %v643 = vshrl.u32 %v642, 7
        %v644 = vsub.s32 0, %v643
        %v645 = vrot.slane %v640, %v644
        %v648 = vsel %vm385, %v633, 0
        %650 = vmatprep.subr.mxu0 0.0
        %651 = vmatpush1.msra.mxu0 0.0
        %652 = vmatprep.subr.mxu0 0.0
        %653 = vmatpush1.msra.mxu0 0.0
        %654 = vmatprep.subr.mxu0 0.0
        %655 = vmatpush1.msra.mxu0 0.0
        %656 = vmatprep.subr.mxu0 0.0
        %657 = vmatpush1.msra.mxu0 0.0
        %658 = vmatprep.subr.mxu0 0.0
        %659 = vmatpush1.msra.mxu0 0.0
        %660 = vmatprep.subr.mxu0 0.0
        %661 = vmatpush1.msra.mxu0 0.0
        %662 = vmatprep.subr.mxu0 0.0
        %663 = vmatpush1.msra.mxu0 0.0
        %664 = vmatprep.subr.mxu0 0.0
        %665 = vmatpush1.msra.mxu0 0.0
        %666 = vmatprep.subr.mxu0 0.0
        %667 = vmatpush1.msra.mxu0 0.0
        %668 = vmatprep.subr.mxu0 0.0
        %669 = vmatpush1.msra.mxu0 0.0
        %670 = vmatprep.subr.mxu0 0.0
        %671 = vmatpush1.msra.mxu0 0.0
        %672 = vmatprep.subr.mxu0 0.0
        %673 = vmatpush1.msra.mxu0 0.0
        %674 = vmatprep.subr.mxu0 0.0
        %675 = vmatpush1.msra.mxu0 %v638
        %676 = vmatprep.subr.mxu0 0.0
        %677 = vmatpush1.msra.mxu0 %v637
        %678 = vmatprep.subr.mxu0 0.0
        %679 = vmatpush1.msra.mxu0 %v636
        %680 = vmatprep.subr.mxu0 0.0
        %681 = vmatpush1.msra.mxu0 %v635
        %682 = vmatprep.subr.mxu0 0.0
        %683 = vmatpush2.msra.mxu0 0.0
        %684 = vmatprep.subr.mxu0 0.0
        %685 = vmatpush2.msra.mxu0 0.0
        %686 = vmatprep.subr.mxu0 0.0
        %687 = vmatpush2.msra.mxu0 0.0
        %688 = vmatprep.subr.mxu0 0.0
        %689 = vmatpush2.msra.mxu0 0.0
        %690 = vmatprep.subr.mxu0 0.0
        %691 = vmatpush2.msra.mxu0 0.0
        %692 = vmatprep.subr.mxu0 0.0
        %693 = vmatpush2.msra.mxu0 0.0
        %694 = vmatprep.subr.mxu0 0.0
        %695 = vmatpush2.msra.mxu0 0.0
        %696 = vmatprep.subr.mxu0 0.0
        %697 = vmatpush2.msra.mxu0 0.0
        %698 = vmatprep.subr.mxu0 0.0
        %699 = vmatpush2.msra.mxu0 0.0
        %700 = vmatprep.subr.mxu0 0.0
        %701 = vmatpush2.msra.mxu0 0.0
        %702 = vmatprep.subr.mxu0 0.0
        %703 = vmatpush2.msra.mxu0 0.0
        %704 = vmatprep.subr.mxu0 0.0
        %705 = vmatpush2.msra.mxu0 0.0
        %706 = vmatprep.subr.mxu0 0.0
        %707 = vmatpush2.msra.mxu0 0.0
        %708 = vmatprep.subr.mxu0 0.0
        %709 = vmatpush2.msra.mxu0 0.0
        %710 = vmatprep.subr.mxu0 0.0
        %711 = vmatpush2.msra.mxu0 0.0
        %712 = vmatprep.subr.mxu0 0.0
        %713 = vmatpush2.msra.mxu0 0.0
        %714 = vmatprep.mubr.f32.mxu0 0.0
        %715 = vmatmul.mubr.f32.gmra.mxu0 %v648
        %v716 = vpop.f32.mrf.mxu0
        %v717 = vadd.f32 %v645, %v716
        %v718 = vpop.f32.mrf.mxu0
        %719 = vdwg.mxu0
        %v720 = vtanh.pop %v717
        %s721 = scalar_lea.vmem [#allocation2], 128
        %v722 = vld [vmem:[%s721] sm:$0xff]
        %v723 = vld [vmem:[%s721 + $0x8] sm:$0xff]
        %v724 = vld [vmem:[%s721 + $0x10] sm:$0xff]
        %v725 = vld [vmem:[%s721 + $0x18] sm:$0xff]
        %s726 = scalar_lea.vmem %s4, 4
        %v727 = vld [vmem:[%s726] sm:$0x1]
        %v729 = vlaneseq
        %v730 = vshrl.u32 %v729, 7
        %v731 = vsub.s32 0, %v730
        %v732 = vrot.slane %v727, %v731
        %v735 = vsel %vm385, %v720, 0
        %737 = vmatprep.subr.mxu0 0.0
        %738 = vmatpush1.msra.mxu0 0.0
        %739 = vmatprep.subr.mxu0 0.0
        %740 = vmatpush1.msra.mxu0 0.0
        %741 = vmatprep.subr.mxu0 0.0
        %742 = vmatpush1.msra.mxu0 0.0
        %743 = vmatprep.subr.mxu0 0.0
        %744 = vmatpush1.msra.mxu0 0.0
        %745 = vmatprep.subr.mxu0 0.0
        %746 = vmatpush1.msra.mxu0 0.0
        %747 = vmatprep.subr.mxu0 0.0
        %748 = vmatpush1.msra.mxu0 0.0
        %749 = vmatprep.subr.mxu0 0.0
        %750 = vmatpush1.msra.mxu0 0.0
        %751 = vmatprep.subr.mxu0 0.0
        %752 = vmatpush1.msra.mxu0 0.0
        %753 = vmatprep.subr.mxu0 0.0
        %754 = vmatpush1.msra.mxu0 0.0
        %755 = vmatprep.subr.mxu0 0.0
        %756 = vmatpush1.msra.mxu0 0.0
        %757 = vmatprep.subr.mxu0 0.0
        %758 = vmatpush1.msra.mxu0 0.0
        %759 = vmatprep.subr.mxu0 0.0
        %760 = vmatpush1.msra.mxu0 0.0
        %761 = vmatprep.subr.mxu0 0.0
        %762 = vmatpush1.msra.mxu0 %v725
        %763 = vmatprep.subr.mxu0 0.0
        %764 = vmatpush1.msra.mxu0 %v724
        %765 = vmatprep.subr.mxu0 0.0
        %766 = vmatpush1.msra.mxu0 %v723
        %767 = vmatprep.subr.mxu0 0.0
        %768 = vmatpush1.msra.mxu0 %v722
        %769 = vmatprep.subr.mxu0 0.0
        %770 = vmatpush2.msra.mxu0 0.0
        %771 = vmatprep.subr.mxu0 0.0
        %772 = vmatpush2.msra.mxu0 0.0
        %773 = vmatprep.subr.mxu0 0.0
        %774 = vmatpush2.msra.mxu0 0.0
        %775 = vmatprep.subr.mxu0 0.0
        %776 = vmatpush2.msra.mxu0 0.0
        %777 = vmatprep.subr.mxu0 0.0
        %778 = vmatpush2.msra.mxu0 0.0
        %779 = vmatprep.subr.mxu0 0.0
        %780 = vmatpush2.msra.mxu0 0.0
        %781 = vmatprep.subr.mxu0 0.0
        %782 = vmatpush2.msra.mxu0 0.0
        %783 = vmatprep.subr.mxu0 0.0
        %784 = vmatpush2.msra.mxu0 0.0
        %785 = vmatprep.subr.mxu0 0.0
        %786 = vmatpush2.msra.mxu0 0.0
        %787 = vmatprep.subr.mxu0 0.0
        %788 = vmatpush2.msra.mxu0 0.0
        %789 = vmatprep.subr.mxu0 0.0
        %790 = vmatpush2.msra.mxu0 0.0
        %791 = vmatprep.subr.mxu0 0.0
        %792 = vmatpush2.msra.mxu0 0.0
        %793 = vmatprep.subr.mxu0 0.0
        %794 = vmatpush2.msra.mxu0 0.0
        %795 = vmatprep.subr.mxu0 0.0
        %796 = vmatpush2.msra.mxu0 0.0
        %797 = vmatprep.subr.mxu0 0.0
        %798 = vmatpush2.msra.mxu0 0.0
        %799 = vmatprep.subr.mxu0 0.0
        %800 = vmatpush2.msra.mxu0 0.0
        %801 = vmatprep.mubr.f32.mxu0 0.0
        %802 = vmatmul.mubr.f32.gmra.mxu0 %v735
        %v803 = vpop.f32.mrf.mxu0
        %v804 = vadd.f32 %v732, %v803
        %v805 = vpop.f32.mrf.mxu0
        %806 = vdwg.mxu0
        %v807 = vtanh.pop %v804
        %v808 = vld [vmem:[%s5] sm:$0xff]
        %v809 = vld [vmem:[%s5 + $0x8] sm:$0xff]
        %v810 = vld [vmem:[%s5 + $0x10] sm:$0xff]
        %v811 = vld [vmem:[%s5 + $0x18] sm:$0xff]
        %v812 = vld [vmem:[%s6] sm:$0x1]
        %v814 = vlaneseq
        %v815 = vshrl.u32 %v814, 7
        %v816 = vsub.s32 0, %v815
        %v817 = vrot.slane %v812, %v816
        %v820 = vsel %vm385, %v807, 0
        %822 = vmatprep.subr.mxu0 0.0
        %823 = vmatpush1.msra.mxu0 0.0
        %824 = vmatprep.subr.mxu0 0.0
        %825 = vmatpush1.msra.mxu0 0.0
        %826 = vmatprep.subr.mxu0 0.0
        %827 = vmatpush1.msra.mxu0 0.0
        %828 = vmatprep.subr.mxu0 0.0
        %829 = vmatpush1.msra.mxu0 0.0
        %830 = vmatprep.subr.mxu0 0.0
        %831 = vmatpush1.msra.mxu0 0.0
        %832 = vmatprep.subr.mxu0 0.0
        %833 = vmatpush1.msra.mxu0 0.0
        %834 = vmatprep.subr.mxu0 0.0
        %835 = vmatpush1.msra.mxu0 0.0
        %836 = vmatprep.subr.mxu0 0.0
        %837 = vmatpush1.msra.mxu0 0.0
        %838 = vmatprep.subr.mxu0 0.0
        %839 = vmatpush1.msra.mxu0 0.0
        %840 = vmatprep.subr.mxu0 0.0
        %841 = vmatpush1.msra.mxu0 0.0
        %842 = vmatprep.subr.mxu0 0.0
        %843 = vmatpush1.msra.mxu0 0.0
        %844 = vmatprep.subr.mxu0 0.0
        %845 = vmatpush1.msra.mxu0 0.0
        %846 = vmatprep.subr.mxu0 0.0
        %847 = vmatpush1.msra.mxu0 %v811
        %848 = vmatprep.subr.mxu0 0.0
        %849 = vmatpush1.msra.mxu0 %v810
        %850 = vmatprep.subr.mxu0 0.0
        %851 = vmatpush1.msra.mxu0 %v809
        %852 = vmatprep.subr.mxu0 0.0
        %853 = vmatpush1.msra.mxu0 %v808
        %854 = vmatprep.subr.mxu0 0.0
        %855 = vmatpush2.msra.mxu0 0.0
        %856 = vmatprep.subr.mxu0 0.0
        %857 = vmatpush2.msra.mxu0 0.0
        %858 = vmatprep.subr.mxu0 0.0
        %859 = vmatpush2.msra.mxu0 0.0
        %860 = vmatprep.subr.mxu0 0.0
        %861 = vmatpush2.msra.mxu0 0.0
        %862 = vmatprep.subr.mxu0 0.0
        %863 = vmatpush2.msra.mxu0 0.0
        %864 = vmatprep.subr.mxu0 0.0
        %865 = vmatpush2.msra.mxu0 0.0
        %866 = vmatprep.subr.mxu0 0.0
        %867 = vmatpush2.msra.mxu0 0.0
        %868 = vmatprep.subr.mxu0 0.0
        %869 = vmatpush2.msra.mxu0 0.0
        %870 = vmatprep.subr.mxu0 0.0
        %871 = vmatpush2.msra.mxu0 0.0
        %872 = vmatprep.subr.mxu0 0.0
        %873 = vmatpush2.msra.mxu0 0.0
        %874 = vmatprep.subr.mxu0 0.0
        %875 = vmatpush2.msra.mxu0 0.0
        %876 = vmatprep.subr.mxu0 0.0
        %877 = vmatpush2.msra.mxu0 0.0
        %878 = vmatprep.subr.mxu0 0.0
        %879 = vmatpush2.msra.mxu0 0.0
        %880 = vmatprep.subr.mxu0 0.0
        %881 = vmatpush2.msra.mxu0 0.0
        %882 = vmatprep.subr.mxu0 0.0
        %883 = vmatpush2.msra.mxu0 0.0
        %884 = vmatprep.subr.mxu0 0.0
        %885 = vmatpush2.msra.mxu0 0.0
        %886 = vmatprep.mubr.f32.mxu0 0.0
        %887 = vmatmul.mubr.f32.gmra.mxu0 %v820
        %v888 = vpop.f32.mrf.mxu0
        %v889 = vadd.f32 %v817, %v888
        %v890 = vpop.f32.mrf.mxu0
        %891 = vdwg.mxu0
        %vm892 = vcmask 64512
        %893 = vst.msk [vmem:[%s288] sm:$0xff] %vm892, %v889
        %p894 = scmp.lt.s32.totalorder %s19, 1
        %s895 = scalar_select %p894, %s19, 1
        %s896 = smul.addr %s895, 8
        %s897 = scalar_lea.vmem %s7, %s896
        // Predicated region
        $region53: #{tpu_custom_call.1} parent=47 // pred_check
          %p898 = pneg %p189
        $region54: #{tpu_custom_call.1} parent=47 // pred_check_branch
          %900 = sbr.rel (%p898) target = $region56
        $region55: #{tpu_custom_call.1} parent=47 // pred_region
          _
        $region56: #{tpu_custom_call.1} parent=47 // pred_fallthru
          _
      $region48: #{tpu_custom_call.1} parent=5 // pred_fallthru
        _
      %p901 = scmp.le.s32.totalorder 2, %s14
      // Predicated region
      $region57: #{tpu_custom_call.1} parent=5 // pred_check
        %p902 = pneg %p901
      $region58: #{tpu_custom_call.1} parent=5 // pred_check_branch
        %904 = sbr.rel (%p902) target = $region60
      $region59: #{tpu_custom_call.1} parent=5 // pred_region
        %s905 = ssub.s32 %s14, 2
        // Predicated region
        $region61: #{tpu_custom_call.1} parent=59 // pred_check
          %p906 = pneg %p195
        $region62: #{tpu_custom_call.1} parent=59 // pred_check_branch
          %908 = sbr.rel (%p906) target = $region64
        $region63: #{tpu_custom_call.1} parent=59 // pred_region
          %p909 = scmp.lt.s32.totalorder %s20, 1
          %s910 = scalar_select %p909, %s20, 1
          %s911 = smul.addr %s910, 8
          %s912 = scalar_lea.vmem %s7, %s911
        $region64: #{tpu_custom_call.1} parent=59 // pred_fallthru
          _
      $region60: #{tpu_custom_call.1} parent=5 // pred_fallthru
        _
    $region6: #{tpu_custom_call.1} parent=1 // loop_footer
      %s18 = sadd.s32 1, %s14
    $region7: #{tpu_custom_call.1} parent=1 // loop_footer_branch
      %13 = sbr.rel target = $region3
    $region8: #{tpu_custom_call.1} parent=1 // loop_exit
      _
    %913 = vsyncpa [#allocation3], 1
    %s914 = scalar_lea.sflag [#allocation3], 1
    %915 = vsyncpa %s914, 1

</llo_original>
